<compile_context>
chip_gen: v7x
topology: tpu7x:2x2x1
jax: 0.10.0
libtpu: 0.0.40
codegen_flags: <defaults>
</compile_context>

<pallas_src>
import functools

import jax
import jax.numpy as jnp
from jax.experimental import pallas as pl
from jax.experimental.pallas import tpu as pltpu


def _fused_conv_unshuffle_kernel(x_ref, w_ref, o_ref):
    # x_ref: (1, 1, TH2+1, W2+1, 4*Cin)  padded + space-to-depth halo strip
    # w_ref: (2, 2, 4*Cin, 4*Cout)       folded conv weights (VMEM-resident)
    # o_ref: (1, TH2, W2, 4*Cout)        PixelUnshuffle'd output strip
    th2 = o_ref.shape[1]
    w2 = o_ref.shape[2]
    cin4 = x_ref.shape[4]
    cout4 = o_ref.shape[3]

    xs = x_ref[0, 0]                                   # (TH2+1, W2+1, 4*Cin)

    acc = jnp.zeros((th2 * w2, cout4), jnp.float32)
    for qy in range(2):
        for qx in range(2):
            patch = xs[qy:qy + th2, qx:qx + w2, :].reshape(th2 * w2, cin4)
            acc = acc + jnp.dot(patch, w_ref[qy, qx],
                                preferred_element_type=jnp.float32)

    o_ref[0] = acc.reshape(th2, w2, cout4).astype(o_ref.dtype)


def _pick_strip_rows(h2, w2, cin4, cout4, itemsize,
                     budget_bytes=6 * 1024 * 1024):
    """Largest divisor of h2 whose per-step VMEM working set fits the budget."""
    best = 1
    for th2 in range(1, h2 + 1):
        if h2 % th2:
            continue
        in_b = 2 * (th2 + 1) * (w2 + 1) * cin4 * itemsize   # 2x buffered input
        out_b = 2 * th2 * w2 * cout4 * itemsize             # 2x buffered output
        acc_b = th2 * w2 * cout4 * 4                        # f32 accumulator
        w_b = 2 * 4 * cin4 * cout4 * itemsize               # weights
        if in_b + out_b + acc_b + w_b <= budget_bytes:
            best = th2
    return best


@functools.partial(jax.jit, static_argnames=("strip_rows",))
def downsample(x, weight, *, strip_rows=None):
    """Forward of Downsample: conv3x3(pad=1, no bias) + PixelUnshuffle(2).

    x:      (B, C, H, W)     NCHW, like the PyTorch module (H, W even).
    weight: (C//2, C, 3, 3)  OIHW, like nn.Conv2d.weight.
    returns (B, 2*C, H//2, W//2).
    """
    B, cin, H, W = x.shape
    cout = weight.shape[0]
    assert H % 2 == 0 and W % 2 == 0, "PixelUnshuffle(2) needs even H, W"
    h2, w2 = H // 2, W // 2
    cin4, cout4 = 4 * cin, 4 * cout

    # ---- Input layout (pure data movement, fused by XLA in the wrapper):
    # NCHW -> NHWC -> zero-pad halo -> space-to-depth(2) -> overlapping strips.
    x_nhwc = jnp.transpose(x, (0, 2, 3, 1))                      # (B,H,W,Cin)
    x_pad = jnp.pad(x_nhwc, ((0, 0), (1, 1), (1, 1), (0, 0)))    # (B,H+2,W+2,Cin)
    hs, ws = h2 + 1, w2 + 1
    x_s2d = x_pad.reshape(B, hs, 2, ws, 2, cin)
    x_s2d = jnp.transpose(x_s2d, (0, 1, 3, 2, 4, 5)).reshape(B, hs, ws, cin4)
    # channel order: (py, px, cin) -> py*2*Cin + px*Cin + cin

    if strip_rows is None:
        strip_rows = _pick_strip_rows(h2, w2, cin4, cout4, x.dtype.itemsize)
    th2 = strip_rows
    assert h2 % th2 == 0, "strip_rows must divide H//2"
    n_strips = h2 // th2
    # Overlapping strips (1 halo row each) so BlockSpecs stay plain Blocked.
    ridx = jnp.arange(n_strips)[:, None] * th2 + jnp.arange(th2 + 1)[None, :]
    x_strips = x_s2d[:, ridx]                  # (B, n_strips, TH2+1, ws, 4*Cin)

    # ---- Fold the 3x3 conv + PixelUnshuffle(2) into a 2x2 conv over the
    # space-to-depth input (one-time, tiny rearrangement of the weights):
    # w2x2[qy, qx, py*2Cin+px*Cin+ci, co*4+2i+j] = w[co, ci, (2qy+py)-i, (2qx+px)-j]
    w_t = jnp.transpose(weight, (2, 3, 1, 0))          # (dy, dx, Cin, Cout)
    w_full = jnp.zeros((2, 2, 2, 2, cin, cout, 2, 2), w_t.dtype)
    for dy in range(3):
        for dx in range(3):
            for i in range(2):
                for j in range(2):
                    ky, kx = dy + i, dx + j
                    w_full = w_full.at[ky // 2, kx // 2, ky % 2, kx % 2,
                                       :, :, i, j].set(w_t[dy, dx])
    w2x2 = w_full.reshape(2, 2, cin4, cout4)
    # TODO(synk): if 2*n_feat is not a multiple of 128, pad cout4 up to 128 for
    # fully unmasked stores (typical n_feat multiples of 64 are already dense).

    y = pl.pallas_call(
        _fused_conv_unshuffle_kernel,
        out_shape=jax.ShapeDtypeStruct((B, h2, w2, cout4), x.dtype),
        grid_spec=pltpu.PrefetchScalarGridSpec(
            num_scalar_prefetch=0,
            grid=(B, n_strips),
            in_specs=[
                pl.BlockSpec((1, 1, th2 + 1, ws, cin4),
                             lambda b, s: (b, s, 0, 0, 0)),
                # Constant index map -> weights stay VMEM-resident (no re-DMA).
                pl.BlockSpec((2, 2, cin4, cout4),
                             lambda b, s: (0, 0, 0, 0)),
            ],
            out_specs=pl.BlockSpec((1, th2, w2, cout4),
                                   lambda b, s: (b, s, 0, 0)),
        ),
        compiler_params=pltpu.CompilerParams(
            dimension_semantics=("parallel", "parallel"),
            vmem_limit_bytes=32 * 1024 * 1024,
        ),
    )(x_strips, w2x2)

    # Kernel output is already PixelUnshuffle'd NHWC with PyTorch's channel
    # order (c*4 + 2i + j); only the NCHW module contract remains.
    return jnp.transpose(y, (0, 3, 1, 2))


def _reference_downsample(x, weight):
    y = jax.lax.conv_general_dilated(
        x.astype(jnp.float32), weight.astype(jnp.float32),
        window_strides=(1, 1), padding=((1, 1), (1, 1)),
        dimension_numbers=("NCHW", "OIHW", "NCHW"))
    B, C, H, W = y.shape
    y = y.reshape(B, C, H // 2, 2, W // 2, 2)
    y = jnp.transpose(y, (0, 1, 3, 5, 2, 4))
    return y.reshape(B, C * 4, H // 2, W // 2).astype(x.dtype)


if __name__ == "__main__":
    key = jax.random.PRNGKey(0)
    kx, kw = jax.random.split(key)

    batch, n_feat, H, W = 2, 4, 16, 16
    x = jax.random.normal(kx, (batch, n_feat, H, W), dtype=jnp.float32)
    # nn.Conv2d(n_feat, n_feat // 2, 3, bias=False) weight, OIHW layout.
    weight = jax.random.normal(kw, (n_feat // 2, n_feat, 3, 3),
                               dtype=jnp.float32) * 0.1

    # strip_rows=4 -> 2 row-strips per image, exercising the tiled grid path.
    out = downsample(x, weight, strip_rows=4)
    out = jax.block_until_ready(out)

    ref = _reference_downsample(x, weight)
    assert out.shape == (batch, 2 * n_feat, H // 2, W // 2)
    assert jnp.allclose(out, ref, atol=1e-4, rtol=1e-4), "mismatch vs reference"

    print("KERNEL_OK")
</pallas_src>

<mosaic_0001>
module attributes {stable_mosaic.version = 11 : i64} {
  func.func @_fused_conv_unshuffle_kernel(%arg0: i32, %arg1: i32, %arg2: memref<1x1x5x9x16xf32, #tpu.memory_space<vmem>>, %arg3: memref<2x2x16x8xf32, #tpu.memory_space<vmem>>, %arg4: memref<1x4x8x8xf32, #tpu.memory_space<vmem>>) attributes {dimension_semantics = [#tpu.dimension_semantics<parallel>, #tpu.dimension_semantics<parallel>], iteration_bounds = array<i64: 2, 2>, scalar_prefetch = 0 : i64, scratch_operands = 0 : i64, tpu.core_type = #tpu.core_type<tc>, window_params = [{transform_indices = @transform_0, window_bounds = array<i64: 1, 1, 5, 9, 16>}, {pipeline_mode = #tpu.pipeline_mode<synchronous>, transform_indices = @transform_1, window_bounds = array<i64: 2, 2, 16, 8>}, {transform_indices = @transform_2, window_bounds = array<i64: 1, 4, 8, 8>}]} {
    %c0 = arith.constant 0 : index
    %c0_0 = arith.constant 0 : index
    %c0_1 = arith.constant 0 : index
    %c0_2 = arith.constant 0 : index
    %c0_3 = arith.constant 0 : index
    %0 = vector.load %arg2[%c0, %c0_0, %c0_1, %c0_2, %c0_3] : memref<1x1x5x9x16xf32, #tpu.memory_space<vmem>>, vector<1x1x5x9x16xf32>
    %1 = vector.shape_cast %0 : vector<1x1x5x9x16xf32> to vector<5x9x16xf32>
    %cst = arith.constant 0.000000e+00 : f32
    %2 = vector.broadcast %cst : f32 to vector<32x8xf32>
    %3 = vector.extract_strided_slice %1 {offsets = [0, 0, 0], sizes = [4, 8, 16], strides = [1, 1, 1]} : vector<5x9x16xf32> to vector<4x8x16xf32>
    %4 = vector.shape_cast %3 : vector<4x8x16xf32> to vector<32x16xf32>
    %c0_4 = arith.constant 0 : index
    %c0_5 = arith.constant 0 : index
    %c0_6 = arith.constant 0 : index
    %c0_7 = arith.constant 0 : index
    %5 = vector.load %arg3[%c0_4, %c0_5, %c0_6, %c0_7] : memref<2x2x16x8xf32, #tpu.memory_space<vmem>>, vector<1x1x16x8xf32>
    %6 = vector.shape_cast %5 : vector<1x1x16x8xf32> to vector<16x8xf32>
    %cst_8 = arith.constant dense<0.000000e+00> : vector<32x8xf32>
    %7 = tpu.matmul %4, %6, %cst_8 {dimension_numbers = #tpu.dot_dimension_numbers<[1], [0], [0], [1], [0, 0, 1, 1], [], []>} : vector<32x16xf32>, vector<16x8xf32>, vector<32x8xf32> -> vector<32x8xf32>
    %8 = arith.addf %2, %7 : vector<32x8xf32>
    %9 = vector.extract_strided_slice %1 {offsets = [0, 1, 0], sizes = [4, 8, 16], strides = [1, 1, 1]} : vector<5x9x16xf32> to vector<4x8x16xf32>
    %10 = vector.shape_cast %9 : vector<4x8x16xf32> to vector<32x16xf32>
    %c0_9 = arith.constant 0 : index
    %c1 = arith.constant 1 : index
    %c0_10 = arith.constant 0 : index
    %c0_11 = arith.constant 0 : index
    %11 = vector.load %arg3[%c0_9, %c1, %c0_10, %c0_11] : memref<2x2x16x8xf32, #tpu.memory_space<vmem>>, vector<1x1x16x8xf32>
    %12 = vector.shape_cast %11 : vector<1x1x16x8xf32> to vector<16x8xf32>
    %cst_12 = arith.constant dense<0.000000e+00> : vector<32x8xf32>
    %13 = tpu.matmul %10, %12, %cst_12 {dimension_numbers = #tpu.dot_dimension_numbers<[1], [0], [0], [1], [0, 0, 1, 1], [], []>} : vector<32x16xf32>, vector<16x8xf32>, vector<32x8xf32> -> vector<32x8xf32>
    %14 = arith.addf %8, %13 : vector<32x8xf32>
    %15 = vector.extract_strided_slice %1 {offsets = [1, 0, 0], sizes = [4, 8, 16], strides = [1, 1, 1]} : vector<5x9x16xf32> to vector<4x8x16xf32>
    %16 = vector.shape_cast %15 : vector<4x8x16xf32> to vector<32x16xf32>
    %c1_13 = arith.constant 1 : index
    %c0_14 = arith.constant 0 : index
    %c0_15 = arith.constant 0 : index
    %c0_16 = arith.constant 0 : index
    %17 = vector.load %arg3[%c1_13, %c0_14, %c0_15, %c0_16] : memref<2x2x16x8xf32, #tpu.memory_space<vmem>>, vector<1x1x16x8xf32>
    %18 = vector.shape_cast %17 : vector<1x1x16x8xf32> to vector<16x8xf32>
    %cst_17 = arith.constant dense<0.000000e+00> : vector<32x8xf32>
    %19 = tpu.matmul %16, %18, %cst_17 {dimension_numbers = #tpu.dot_dimension_numbers<[1], [0], [0], [1], [0, 0, 1, 1], [], []>} : vector<32x16xf32>, vector<16x8xf32>, vector<32x8xf32> -> vector<32x8xf32>
    %20 = arith.addf %14, %19 : vector<32x8xf32>
    %21 = vector.extract_strided_slice %1 {offsets = [1, 1, 0], sizes = [4, 8, 16], strides = [1, 1, 1]} : vector<5x9x16xf32> to vector<4x8x16xf32>
    %22 = vector.shape_cast %21 : vector<4x8x16xf32> to vector<32x16xf32>
    %c1_18 = arith.constant 1 : index
    %c1_19 = arith.constant 1 : index
    %c0_20 = arith.constant 0 : index
    %c0_21 = arith.constant 0 : index
    %23 = vector.load %arg3[%c1_18, %c1_19, %c0_20, %c0_21] : memref<2x2x16x8xf32, #tpu.memory_space<vmem>>, vector<1x1x16x8xf32>
    %24 = vector.shape_cast %23 : vector<1x1x16x8xf32> to vector<16x8xf32>
    %cst_22 = arith.constant dense<0.000000e+00> : vector<32x8xf32>
    %25 = tpu.matmul %22, %24, %cst_22 {dimension_numbers = #tpu.dot_dimension_numbers<[1], [0], [0], [1], [0, 0, 1, 1], [], []>} : vector<32x16xf32>, vector<16x8xf32>, vector<32x8xf32> -> vector<32x8xf32>
    %26 = arith.addf %20, %25 : vector<32x8xf32>
    %27 = vector.shape_cast %26 : vector<32x8xf32> to vector<4x8x8xf32>
    %c0_23 = arith.constant 0 : index
    %c0_24 = arith.constant 0 : index
    %c0_25 = arith.constant 0 : index
    %c0_26 = arith.constant 0 : index
    %28 = vector.load %arg4[%c0_23, %c0_24, %c0_25, %c0_26] : memref<1x4x8x8xf32, #tpu.memory_space<vmem>>, vector<1x4x8x8xf32>
    %29 = vector.shape_cast %28 : vector<1x4x8x8xf32> to vector<4x8x8xf32>
    %30 = vector.shape_cast %27 : vector<4x8x8xf32> to vector<1x4x8x8xf32>
    tpu.vector_store %arg4[%c0_23, %c0_24, %c0_25, %c0_26], %30 {strides = array<i32>} : memref<1x4x8x8xf32, #tpu.memory_space<vmem>>, vector<1x4x8x8xf32>,
    return
  }
  func.func @transform_0(%arg0: i32, %arg1: i32) -> (i32, i32, i32, i32, i32) {
    %c0_i32 = arith.constant 0 : i32
    %c0_i32_0 = arith.constant 0 : i32
    %c0_i32_1 = arith.constant 0 : i32
    %c0_i32_2 = arith.constant 0 : i32
    return %arg0, %arg1, %c0_i32, %c0_i32_0, %c0_i32_1 : i32, i32, i32, i32, i32
  }
  func.func @transform_1(%arg0: i32, %arg1: i32) -> (i32, i32, i32, i32) {
    %c0_i32 = arith.constant 0 : i32
    %c0_i32_0 = arith.constant 0 : i32
    %c0_i32_1 = arith.constant 0 : i32
    %c0_i32_2 = arith.constant 0 : i32
    %c0_i32_3 = arith.constant 0 : i32
    return %c0_i32, %c0_i32_0, %c0_i32_1, %c0_i32_2 : i32, i32, i32, i32
  }
  func.func @transform_2(%arg0: i32, %arg1: i32) -> (i32, i32, i32, i32) {
    %c0_i32 = arith.constant 0 : i32
    %c0_i32_0 = arith.constant 0 : i32
    %c0_i32_1 = arith.constant 0 : i32
    return %arg0, %arg1, %c0_i32, %c0_i32_0 : i32, i32, i32, i32
  }
}

</mosaic_0001>

<llo_original>
// kernel: downsample.1
$region0: #{downsample.1}
  #allocation0 [shape = 'u32[]', space=smem, size = 0x4, offset = 0x4, fixed_abs, tag = 'smem constant byte address 0x4 - core index']
  #allocation1 [shape = 'u32[144,128]{1,0:T(1,128)}', space=vmem, size = 0x12000, scoped, tag = 'internal scratch']
  %s0 = inlined_call_operand.vmem [shape: f32[2,2,5,9,16], index: 0, kind: input, shape index: {}]
  %s1 = inlined_call_operand.vmem [shape: f32[2,2,16,8], index: 1, kind: input, shape index: {}]
  %s2 = inlined_call_operand.vmem [shape: f32[2,8,8,8], index: 2, kind: output, shape index: {}]
  %s3 = sld [smem:[#allocation0]]
  $region41: #{downsample.1} parent=0
    _
  %s5 = ssub.s32 1, %s3
  %s6 = scalar_select 0, %s5, %s3
  loop: start=0, step=1, limit=6
  $region2: #{downsample.1} parent=0 // loop_pre_header
    _
  $region3: #{downsample.1} parent=0 // loop_header
    %s8 = sphi 0, %s12
    %p9 = scmp.ge.s32.totalorder %s8, 6
    %s15 = sphi 0, %s27
    %s16 = sphi 0, %s23
    %s17 = sphi 0, %s15
    %s18 = sphi 0, %s16
    %s19 = sphi 0, %s17
    %s20 = sphi 0, %s18
    %s32 = sphi 0, %s34
    %s35 = sphi 0, %s32
    %s36 = sphi 0, %s35
    %s52 = sphi 0, %s36
    %s56 = sphi 0, %s56
    %s58 = sphi 0, %s56
    %s59 = sphi 0, %s58
    %s73 = sphi 0, %s59
    %s81 = sphi 0, %s83
    %s84 = sphi 0, %s81
    %s85 = sphi 0, %s84
    %s101 = sphi 0, %s85
  $region4: #{downsample.1} parent=0 // loop_header_branch
    %11 = sbr.rel (%p9) target = $region8
  $region5: #{downsample.1} parent=0 // loop_body
    %s13 = ssub.s32 %s8, 1
    %s14 = ssub.s32 %s8, 2
    %s21 = sadd.s32 1, %s16
    %p22 = scmp.ge.s32.totalorder %s21, 2
    %s23 = scalar_select %p22, 0, %s21
    %s24 = sadd.s32 1, %s15
    %s25 = scalar_select %p22, %s24, %s15
    %p26 = scmp.ge.s32.totalorder %s25, 2
    %s27 = scalar_select %p26, 0, %s25
    %s28 = ssub.s32 %s15, %s27
    %s29 = ssub.s32 %s16, %s23
    %s30 = sor.u32 %s28, %s29
    %p31 = scmp.eq.s32.totalorder %s30, 0
    %s33 = sadd.s32 %s32, 1
    %s34 = scalar_select %p31, %s32, %s33
    %p37 = pneg %p31
    %p38 = scmp.eq.s32.totalorder %s8, 3
    %p39 = por %p37, %p38
    %p40 = scmp.ne.s32.totalorder %s32, %s35
    %p41 = scmp.eq.s32.totalorder %s8, 0
    %p42 = por %p40, %p41
    %p43 = scmp.ne.s32.totalorder %s32, %s35
    %p44 = scmp.eq.s32.totalorder %s13, 3
    %p45 = por %p43, %p44
    %p46 = scmp.ne.s32.totalorder %s35, %s36
    %p47 = scmp.eq.s32.totalorder %s13, 0
    %p48 = por %p46, %p47
    %p49 = scmp.ne.s32.totalorder %s35, %s36
    %p50 = scmp.eq.s32.totalorder %s14, 3
    %p51 = por %p49, %p50
    %p53 = scmp.ne.s32.totalorder %s36, %s52
    %p54 = scmp.eq.s32.totalorder %s14, 0
    %p55 = por %p53, %p54
    %s57 = sadd.s32 %s56, 1
    %p60 = scmp.eq.s32.totalorder %s8, 3
    %p61 = scmp.ne.s32.totalorder %s56, %s58
    %p62 = scmp.eq.s32.totalorder %s8, 0
    %p63 = por %p61, %p62
    %p64 = scmp.ne.s32.totalorder %s56, %s58
    %p65 = scmp.eq.s32.totalorder %s13, 3
    %p66 = por %p64, %p65
    %p67 = scmp.ne.s32.totalorder %s58, %s59
    %p68 = scmp.eq.s32.totalorder %s13, 0
    %p69 = por %p67, %p68
    %p70 = scmp.ne.s32.totalorder %s58, %s59
    %p71 = scmp.eq.s32.totalorder %s14, 3
    %p72 = por %p70, %p71
    %p74 = scmp.ne.s32.totalorder %s59, %s73
    %p75 = scmp.eq.s32.totalorder %s14, 0
    %p76 = por %p74, %p75
    %s77 = ssub.s32 %s15, %s27
    %s78 = ssub.s32 %s16, %s23
    %s79 = sor.u32 %s77, %s78
    %p80 = scmp.eq.s32.totalorder %s79, 0
    %s82 = sadd.s32 %s81, 1
    %s83 = scalar_select %p80, %s81, %s82
    %p86 = pneg %p80
    %p87 = scmp.eq.s32.totalorder %s8, 3
    %p88 = por %p86, %p87
    %p89 = scmp.ne.s32.totalorder %s81, %s84
    %p90 = scmp.eq.s32.totalorder %s8, 0
    %p91 = por %p89, %p90
    %p92 = scmp.ne.s32.totalorder %s81, %s84
    %p93 = scmp.eq.s32.totalorder %s13, 3
    %p94 = por %p92, %p93
    %p95 = scmp.ne.s32.totalorder %s84, %s85
    %p96 = scmp.eq.s32.totalorder %s13, 0
    %p97 = por %p95, %p96
    %p98 = scmp.ne.s32.totalorder %s84, %s85
    %p99 = scmp.eq.s32.totalorder %s14, 3
    %p100 = por %p98, %p99
    %p102 = scmp.ne.s32.totalorder %s85, %s101
    %p103 = scmp.eq.s32.totalorder %s14, 0
    %p104 = por %p102, %p103
    %p105 = scmp.le.s32.totalorder 1, %s8
    %p106 = scmp.lt.s32.totalorder %s8, 5
    %p107 = pnand %p105, %p106
    %p108 = pneg %p107
    // Predicated region
    $region9: #{downsample.1} parent=5 // pred_check
      _
    $region10: #{downsample.1} parent=5 // pred_check_branch
      %110 = sbr.rel (%p107) target = $region12
    $region11: #{downsample.1} parent=5 // pred_region
      %s111 = ssub.s32 %s8, 1
      // Predicated region
      $region13: #{downsample.1} parent=11 // pred_check
        %p112 = pneg %p69
      $region14: #{downsample.1} parent=11 // pred_check_branch
        %114 = sbr.rel (%p112) target = $region16
      $region15: #{downsample.1} parent=11 // pred_region
        _
      $region16: #{downsample.1} parent=11 // pred_fallthru
        _
    $region12: #{downsample.1} parent=5 // pred_fallthru
      _
    %p115 = scmp.lt.s32.totalorder %s8, 4
    // Predicated region
    $region17: #{downsample.1} parent=5 // pred_check
      %p116 = pneg %p115
    $region18: #{downsample.1} parent=5 // pred_check_branch
      %118 = sbr.rel (%p116) target = $region20
    $region19: #{downsample.1} parent=5 // pred_region
      // Predicated region
      $region21: #{downsample.1} parent=19 // pred_check
        %p119 = pneg %p42
      $region22: #{downsample.1} parent=19 // pred_check_branch
        %121 = sbr.rel (%p119) target = $region24
      $region23: #{downsample.1} parent=19 // pred_region
        %p122 = scmp.lt.s32.totalorder %s15, 1
        %s123 = scalar_select %p122, %s15, 1
        %p124 = scmp.lt.s32.totalorder %s16, 1
        %s125 = scalar_select %p124, %s16, 1
        %s126 = smul.addr %s125, 10
        %s127 = smul.addr %s123, 20
        %s128 = sadd.s32 %s126, %s127
        %s129 = smul.addr %s128, 8
        %s130 = scalar_lea.vmem %s0, %s129
      $region24: #{downsample.1} parent=19 // pred_fallthru
        _
    $region20: #{downsample.1} parent=5 // pred_fallthru
      _
    %p131 = scmp.le.s32.totalorder 1, %s8
    %p132 = scmp.lt.s32.totalorder %s8, 5
    %p133 = pnand %p131, %p132
    %p134 = pneg %p133
    // Predicated region
    $region25: #{downsample.1} parent=5 // pred_check
      _
    $region26: #{downsample.1} parent=5 // pred_check_branch
      %136 = sbr.rel (%p133) target = $region28
    $region27: #{downsample.1} parent=5 // pred_region
      %s137 = ssub.s32 %s8, 1
      %p138 = scmp.lt.s32.totalorder %s17, 1
      %s139 = scalar_select %p138, %s17, 1
      %p140 = scmp.lt.s32.totalorder %s18, 1
      %s141 = scalar_select %p140, %s18, 1
      %s142 = smul.addr %s141, 10
      %s143 = smul.addr %s139, 20
      %s144 = sadd.s32 %s142, %s143
      %s145 = smul.addr %s144, 8
      %s146 = scalar_lea.vmem %s0, %s145
      %p147 = pneg %p48
      %p148 = pneg %p45
      %p149 = pneg %p69
      %p150 = pneg %p66
      %p151 = pneg %p97
      %p152 = pneg %p94
      %s153 = smul.u32 4, %s18
      %p154 = scmp.lt.s32.totalorder %s17, 1
      %s155 = scalar_select %p154, %s17, 1
      %p156 = scmp.lt.s32.totalorder %s153, 7
      %s157 = scalar_select %p156, %s153, 7
      %s158 = smul.addr %s155, 8
      %s159 = sadd.s32 %s157, %s158
      %s160 = smul.addr %s159, 8
      %s161 = scalar_lea.vmem %s2, %s160
      %p162 = scmp.lt.s32.totalorder %s17, 1
      %s163 = scalar_select %p162, %s17, 1
      %p164 = scmp.lt.s32.totalorder %s18, 1
      %s165 = scalar_select %p164, %s18, 1
      %s166 = smul.addr %s165, 10
      %s167 = smul.addr %s163, 20
      %s168 = sadd.s32 %s166, %s167
      %s169 = smul.addr %s168, 8
      %s170 = scalar_lea.vmem %s0, %s169
      %s171 = smul.u32 4, %s18
      %p172 = scmp.lt.s32.totalorder %s17, 1
      %s173 = scalar_select %p172, %s17, 1
      %p174 = scmp.lt.s32.totalorder %s171, 7
      %s175 = scalar_select %p174, %s171, 7
      %s176 = smul.addr %s173, 8
      %s177 = sadd.s32 %s175, %s176
      %s178 = smul.addr %s177, 8
      %s179 = scalar_lea.vmem %s2, %s178
      %s180 = smul.u32 4, %s18
      %v181 = vld [vmem:[%s170] sm:$0xff]
      %v182 = vld [vmem:[%s170 + $0x8] sm:$0x1]
      %v183 = vld [vmem:[%s170 + $0x10] sm:$0xff]
      %v184 = vld [vmem:[%s170 + $0x18] sm:$0x1]
      %v185 = vld [vmem:[%s170 + $0x20] sm:$0xff]
      %v186 = vld [vmem:[%s170 + $0x28] sm:$0x1]
      %v187 = vld [vmem:[%s170 + $0x30] sm:$0xff]
      %v188 = vld [vmem:[%s170 + $0x38] sm:$0x1]
      %v189 = vld [vmem:[%s170 + $0x40] sm:$0xff]
      %v190 = vld [vmem:[%s170 + $0x48] sm:$0x1]
      %v191 = vld [vmem:[%s1] sm:$0xff]
      %v192 = vld [vmem:[%s1 + $0x8] sm:$0xff]
      %vm201 = vcmask 1046528
      %v202 = vrot.slane %v181, 1
      %v203 = vrot.slane %v182, 1
      %v204 = vsel %vm201, %v202, %v203
      %v205 = vrot.slane %v183, 1
      %v206 = vrot.slane %v184, 1
      %v207 = vsel %vm201, %v205, %v206
      %v208 = vrot.slane %v185, 1
      %v209 = vrot.slane %v186, 1
      %v210 = vsel %vm201, %v208, %v209
      %v211 = vrot.slane %v187, 1
      %v212 = vrot.slane %v188, 1
      %v213 = vsel %vm201, %v211, %v212
      %s214 = scalar_lea.vmem %s1, 16
      %v215 = vld [vmem:[%s214] sm:$0xff]
      %v216 = vld [vmem:[%s214 + $0x8] sm:$0xff]
      %vm217 = vcmask 130048
      %v218 = vsel %vm217, %v204, 0
      %v220 = vsel %vm217, %v207, 0
      %v222 = vsel %vm217, %v210, 0
      %v224 = vsel %vm217, %v213, 0
      %226 = vmatprep.subr.mxu0 0.0
      %227 = vmatpush1.msra.mxu0 %v215
      %228 = vmatprep.subr.mxu0 0.0
      %229 = vmatpush1.msra.mxu0 %v216
      %230 = vmatprep.subr.mxu0 0.0
      %231 = vmatpush1.msra.mxu0 0.0
      %232 = vmatprep.subr.mxu0 0.0
      %233 = vmatpush1.msra.mxu0 0.0
      %234 = vmatprep.subr.mxu0 0.0
      %235 = vmatpush1.msra.mxu0 0.0
      %236 = vmatprep.subr.mxu0 0.0
      %237 = vmatpush1.msra.mxu0 0.0
      %238 = vmatprep.subr.mxu0 0.0
      %239 = vmatpush1.msra.mxu0 0.0
      %240 = vmatprep.subr.mxu0 0.0
      %241 = vmatpush1.msra.mxu0 0.0
      %242 = vmatprep.subr.mxu0 0.0
      %243 = vmatpush1.msra.mxu0 0.0
      %244 = vmatprep.subr.mxu0 0.0
      %245 = vmatpush1.msra.mxu0 0.0
      %246 = vmatprep.subr.mxu0 0.0
      %247 = vmatpush1.msra.mxu0 0.0
      %248 = vmatprep.subr.mxu0 0.0
      %249 = vmatpush1.msra.mxu0 0.0
      %250 = vmatprep.subr.mxu0 0.0
      %251 = vmatpush1.msra.mxu0 0.0
      %252 = vmatprep.subr.mxu0 0.0
      %253 = vmatpush1.msra.mxu0 0.0
      %254 = vmatprep.subr.mxu0 0.0
      %255 = vmatpush1.msra.mxu0 0.0
      %256 = vmatprep.subr.mxu0 0.0
      %257 = vmatpush1.msra.mxu0 0.0
      %258 = vmatprep.subr.mxu0 0.0
      %259 = vmatpush1.msra.mxu0 0.0
      %260 = vmatprep.subr.mxu0 0.0
      %261 = vmatpush1.msra.mxu0 0.0
      %262 = vmatprep.subr.mxu0 0.0
      %263 = vmatpush1.msra.mxu0 0.0
      %264 = vmatprep.subr.mxu0 0.0
      %265 = vmatpush1.msra.mxu0 0.0
      %266 = vmatprep.subr.mxu0 0.0
      %267 = vmatpush1.msra.mxu0 0.0
      %268 = vmatprep.subr.mxu0 0.0
      %269 = vmatpush1.msra.mxu0 0.0
      %270 = vmatprep.subr.mxu0 0.0
      %271 = vmatpush1.msra.mxu0 0.0
      %272 = vmatprep.subr.mxu0 0.0
      %273 = vmatpush1.msra.mxu0 0.0
      %274 = vmatprep.subr.mxu0 0.0
      %275 = vmatpush1.msra.mxu0 0.0
      %276 = vmatprep.subr.mxu0 0.0
      %277 = vmatpush1.msra.mxu0 0.0
      %278 = vmatprep.subr.mxu0 0.0
      %279 = vmatpush1.msra.mxu0 0.0
      %280 = vmatprep.subr.mxu0 0.0
      %281 = vmatpush1.msra.mxu0 0.0
      %282 = vmatprep.subr.mxu0 0.0
      %283 = vmatpush1.msra.mxu0 0.0
      %284 = vmatprep.subr.mxu0 0.0
      %285 = vmatpush1.msra.mxu0 0.0
      %286 = vmatprep.subr.mxu0 0.0
      %287 = vmatpush1.msra.mxu0 0.0
      %288 = vmatprep.subr.mxu0 0.0
      %289 = vmatpush1.msra.mxu0 0.0
      %290 = vmatprep.mubr.f32.mxu0 0.0
      %291 = vmatmul.mubr.f32.gmra.mrb[0].mxu0 %v218
      %v292 = vpop.f32.mrb[0].mxu0
      %v293 = vadd.f32 0.0, %v292
      %v294 = vpop.f32.mrb[0].mxu0
      %295 = vmatprep.mubr.f32.mxu0 0.0
      %296 = vmatmul.mubr.f32.gmra.mrb[0].mxu0 %v220
      %v297 = vpop.f32.mrb[0].mxu0
      %v298 = vadd.f32 0.0, %v297
      %v299 = vpop.f32.mrb[0].mxu0
      %300 = vmatprep.mubr.f32.mxu0 0.0
      %301 = vmatmul.mubr.f32.gmra.mrb[0].mxu0 %v222
      %v302 = vpop.f32.mrb[0].mxu0
      %v303 = vadd.f32 0.0, %v302
      %v304 = vpop.f32.mrb[0].mxu0
      %305 = vmatprep.mubr.f32.mxu0 0.0
      %306 = vmatmul.mubr.f32.gmra.mrb[0].mxu0 %v224
      %v307 = vpop.f32.mrb[0].mxu0
      %v308 = vadd.f32 0.0, %v307
      %v309 = vpop.f32.mrb[0].mxu0
      %310 = vdwg.mxu0
      %v311 = vsel %vm217, %v181, 0
      %v313 = vsel %vm217, %v183, 0
      %v315 = vsel %vm217, %v185, 0
      %v317 = vsel %vm217, %v187, 0
      %319 = vmatprep.subr.mxu0 0.0
      %320 = vmatpush1.msra.mxu0 %v191
      %321 = vmatprep.subr.mxu0 0.0
      %322 = vmatpush1.msra.mxu0 %v192
      %323 = vmatprep.subr.mxu0 0.0
      %324 = vmatpush1.msra.mxu0 0.0
      %325 = vmatprep.subr.mxu0 0.0
      %326 = vmatpush1.msra.mxu0 0.0
      %327 = vmatprep.subr.mxu0 0.0
      %328 = vmatpush1.msra.mxu0 0.0
      %329 = vmatprep.subr.mxu0 0.0
      %330 = vmatpush1.msra.mxu0 0.0
      %331 = vmatprep.subr.mxu0 0.0
      %332 = vmatpush1.msra.mxu0 0.0
      %333 = vmatprep.subr.mxu0 0.0
      %334 = vmatpush1.msra.mxu0 0.0
      %335 = vmatprep.subr.mxu0 0.0
      %336 = vmatpush1.msra.mxu0 0.0
      %337 = vmatprep.subr.mxu0 0.0
      %338 = vmatpush1.msra.mxu0 0.0
      %339 = vmatprep.subr.mxu0 0.0
      %340 = vmatpush1.msra.mxu0 0.0
      %341 = vmatprep.subr.mxu0 0.0
      %342 = vmatpush1.msra.mxu0 0.0
      %343 = vmatprep.subr.mxu0 0.0
      %344 = vmatpush1.msra.mxu0 0.0
      %345 = vmatprep.subr.mxu0 0.0
      %346 = vmatpush1.msra.mxu0 0.0
      %347 = vmatprep.subr.mxu0 0.0
      %348 = vmatpush1.msra.mxu0 0.0
      %349 = vmatprep.subr.mxu0 0.0
      %350 = vmatpush1.msra.mxu0 0.0
      %351 = vmatprep.subr.mxu0 0.0
      %352 = vmatpush1.msra.mxu0 0.0
      %353 = vmatprep.subr.mxu0 0.0
      %354 = vmatpush1.msra.mxu0 0.0
      %355 = vmatprep.subr.mxu0 0.0
      %356 = vmatpush1.msra.mxu0 0.0
      %357 = vmatprep.subr.mxu0 0.0
      %358 = vmatpush1.msra.mxu0 0.0
      %359 = vmatprep.subr.mxu0 0.0
      %360 = vmatpush1.msra.mxu0 0.0
      %361 = vmatprep.subr.mxu0 0.0
      %362 = vmatpush1.msra.mxu0 0.0
      %363 = vmatprep.subr.mxu0 0.0
      %364 = vmatpush1.msra.mxu0 0.0
      %365 = vmatprep.subr.mxu0 0.0
      %366 = vmatpush1.msra.mxu0 0.0
      %367 = vmatprep.subr.mxu0 0.0
      %368 = vmatpush1.msra.mxu0 0.0
      %369 = vmatprep.subr.mxu0 0.0
      %370 = vmatpush1.msra.mxu0 0.0
      %371 = vmatprep.subr.mxu0 0.0
      %372 = vmatpush1.msra.mxu0 0.0
      %373 = vmatprep.subr.mxu0 0.0
      %374 = vmatpush1.msra.mxu0 0.0
      %375 = vmatprep.subr.mxu0 0.0
      %376 = vmatpush1.msra.mxu0 0.0
      %377 = vmatprep.subr.mxu0 0.0
      %378 = vmatpush1.msra.mxu0 0.0
      %379 = vmatprep.subr.mxu0 0.0
      %380 = vmatpush1.msra.mxu0 0.0
      %381 = vmatprep.subr.mxu0 0.0
      %382 = vmatpush1.msra.mxu0 0.0
      %383 = vmatprep.mubr.f32.mxu0 0.0
      %384 = vmatmul.mubr.f32.gmra.mrb[0].mxu0 %v311
      %v385 = vpop.f32.mrb[0].mxu0
      %v386 = vadd.f32 %v293, %v385
      %v387 = vpop.f32.mrb[0].mxu0
      %388 = vmatprep.mubr.f32.mxu0 0.0
      %389 = vmatmul.mubr.f32.gmra.mrb[0].mxu0 %v313
      %v390 = vpop.f32.mrb[0].mxu0
      %v391 = vadd.f32 %v298, %v390
      %v392 = vpop.f32.mrb[0].mxu0
      %393 = vmatprep.mubr.f32.mxu0 0.0
      %394 = vmatmul.mubr.f32.gmra.mrb[0].mxu0 %v315
      %v395 = vpop.f32.mrb[0].mxu0
      %v396 = vadd.f32 %v303, %v395
      %v397 = vpop.f32.mrb[0].mxu0
      %398 = vmatprep.mubr.f32.mxu0 0.0
      %399 = vmatmul.mubr.f32.gmra.mrb[0].mxu0 %v317
      %v400 = vpop.f32.mrb[0].mxu0
      %v401 = vadd.f32 %v308, %v400
      %v402 = vpop.f32.mrb[0].mxu0
      %403 = vdwg.mxu0
      %s404 = scalar_lea.vmem %s1, 32
      %v405 = vld [vmem:[%s404] sm:$0xff]
      %v406 = vld [vmem:[%s404 + $0x8] sm:$0xff]
      %v408 = vsel %vm217, %v189, 0
      %410 = vmatprep.subr.mxu0 0.0
      %411 = vmatpush1.msra.mxu0 %v405
      %412 = vmatprep.subr.mxu0 0.0
      %413 = vmatpush1.msra.mxu0 %v406
      %414 = vmatprep.subr.mxu0 0.0
      %415 = vmatpush1.msra.mxu0 0.0
      %416 = vmatprep.subr.mxu0 0.0
      %417 = vmatpush1.msra.mxu0 0.0
      %418 = vmatprep.subr.mxu0 0.0
      %419 = vmatpush1.msra.mxu0 0.0
      %420 = vmatprep.subr.mxu0 0.0
      %421 = vmatpush1.msra.mxu0 0.0
      %422 = vmatprep.subr.mxu0 0.0
      %423 = vmatpush1.msra.mxu0 0.0
      %424 = vmatprep.subr.mxu0 0.0
      %425 = vmatpush1.msra.mxu0 0.0
      %426 = vmatprep.subr.mxu0 0.0
      %427 = vmatpush1.msra.mxu0 0.0
      %428 = vmatprep.subr.mxu0 0.0
      %429 = vmatpush1.msra.mxu0 0.0
      %430 = vmatprep.subr.mxu0 0.0
      %431 = vmatpush1.msra.mxu0 0.0
      %432 = vmatprep.subr.mxu0 0.0
      %433 = vmatpush1.msra.mxu0 0.0
      %434 = vmatprep.subr.mxu0 0.0
      %435 = vmatpush1.msra.mxu0 0.0
      %436 = vmatprep.subr.mxu0 0.0
      %437 = vmatpush1.msra.mxu0 0.0
      %438 = vmatprep.subr.mxu0 0.0
      %439 = vmatpush1.msra.mxu0 0.0
      %440 = vmatprep.subr.mxu0 0.0
      %441 = vmatpush1.msra.mxu0 0.0
      %442 = vmatprep.subr.mxu0 0.0
      %443 = vmatpush1.msra.mxu0 0.0
      %444 = vmatprep.subr.mxu0 0.0
      %445 = vmatpush1.msra.mxu0 0.0
      %446 = vmatprep.subr.mxu0 0.0
      %447 = vmatpush1.msra.mxu0 0.0
      %448 = vmatprep.subr.mxu0 0.0
      %449 = vmatpush1.msra.mxu0 0.0
      %450 = vmatprep.subr.mxu0 0.0
      %451 = vmatpush1.msra.mxu0 0.0
      %452 = vmatprep.subr.mxu0 0.0
      %453 = vmatpush1.msra.mxu0 0.0
      %454 = vmatprep.subr.mxu0 0.0
      %455 = vmatpush1.msra.mxu0 0.0
      %456 = vmatprep.subr.mxu0 0.0
      %457 = vmatpush1.msra.mxu0 0.0
      %458 = vmatprep.subr.mxu0 0.0
      %459 = vmatpush1.msra.mxu0 0.0
      %460 = vmatprep.subr.mxu0 0.0
      %461 = vmatpush1.msra.mxu0 0.0
      %462 = vmatprep.subr.mxu0 0.0
      %463 = vmatpush1.msra.mxu0 0.0
      %464 = vmatprep.subr.mxu0 0.0
      %465 = vmatpush1.msra.mxu0 0.0
      %466 = vmatprep.subr.mxu0 0.0
      %467 = vmatpush1.msra.mxu0 0.0
      %468 = vmatprep.subr.mxu0 0.0
      %469 = vmatpush1.msra.mxu0 0.0
      %470 = vmatprep.subr.mxu0 0.0
      %471 = vmatpush1.msra.mxu0 0.0
      %472 = vmatprep.subr.mxu0 0.0
      %473 = vmatpush1.msra.mxu0 0.0
      %474 = vmatprep.mubr.f32.mxu0 0.0
      %475 = vmatmul.mubr.f32.gmra.mrb[0].mxu0 %v313
      %v476 = vpop.f32.mrb[0].mxu0
      %v477 = vadd.f32 0.0, %v476
      %v478 = vpop.f32.mrb[0].mxu0
      %479 = vmatprep.mubr.f32.mxu0 0.0
      %480 = vmatmul.mubr.f32.gmra.mrb[0].mxu0 %v315
      %v481 = vpop.f32.mrb[0].mxu0
      %v482 = vadd.f32 0.0, %v481
      %v483 = vpop.f32.mrb[0].mxu0
      %484 = vmatprep.mubr.f32.mxu0 0.0
      %485 = vmatmul.mubr.f32.gmra.mrb[0].mxu0 %v317
      %v486 = vpop.f32.mrb[0].mxu0
      %v487 = vadd.f32 0.0, %v486
      %v488 = vpop.f32.mrb[0].mxu0
      %489 = vmatprep.mubr.f32.mxu0 0.0
      %490 = vmatmul.mubr.f32.gmra.mrb[0].mxu0 %v408
      %v491 = vpop.f32.mrb[0].mxu0
      %v492 = vadd.f32 0.0, %v491
      %v493 = vpop.f32.mrb[0].mxu0
      %494 = vdwg.mxu0
      %v495 = vadd.f32 %v386, %v477
      %v496 = vadd.f32 %v391, %v482
      %v497 = vadd.f32 %v396, %v487
      %v498 = vadd.f32 %v401, %v492
      %v500 = vrot.slane %v189, 1
      %v501 = vrot.slane %v190, 1
      %v502 = vsel %vm201, %v500, %v501
      %s503 = scalar_lea.vmem %s1, 48
      %v504 = vld [vmem:[%s503] sm:$0xff]
      %v505 = vld [vmem:[%s503 + $0x8] sm:$0xff]
      %v506 = vsel %vm217, %v502, 0
      %508 = vmatprep.subr.mxu0 0.0
      %509 = vmatpush1.msra.mxu0 %v504
      %510 = vmatprep.subr.mxu0 0.0
      %511 = vmatpush1.msra.mxu0 %v505
      %512 = vmatprep.subr.mxu0 0.0
      %513 = vmatpush1.msra.mxu0 0.0
      %514 = vmatprep.subr.mxu0 0.0
      %515 = vmatpush1.msra.mxu0 0.0
      %516 = vmatprep.subr.mxu0 0.0
      %517 = vmatpush1.msra.mxu0 0.0
      %518 = vmatprep.subr.mxu0 0.0
      %519 = vmatpush1.msra.mxu0 0.0
      %520 = vmatprep.subr.mxu0 0.0
      %521 = vmatpush1.msra.mxu0 0.0
      %522 = vmatprep.subr.mxu0 0.0
      %523 = vmatpush1.msra.mxu0 0.0
      %524 = vmatprep.subr.mxu0 0.0
      %525 = vmatpush1.msra.mxu0 0.0
      %526 = vmatprep.subr.mxu0 0.0
      %527 = vmatpush1.msra.mxu0 0.0
      %528 = vmatprep.subr.mxu0 0.0
      %529 = vmatpush1.msra.mxu0 0.0
      %530 = vmatprep.subr.mxu0 0.0
      %531 = vmatpush1.msra.mxu0 0.0
      %532 = vmatprep.subr.mxu0 0.0
      %533 = vmatpush1.msra.mxu0 0.0
      %534 = vmatprep.subr.mxu0 0.0
      %535 = vmatpush1.msra.mxu0 0.0
      %536 = vmatprep.subr.mxu0 0.0
      %537 = vmatpush1.msra.mxu0 0.0
      %538 = vmatprep.subr.mxu0 0.0
      %539 = vmatpush1.msra.mxu0 0.0
      %540 = vmatprep.subr.mxu0 0.0
      %541 = vmatpush1.msra.mxu0 0.0
      %542 = vmatprep.subr.mxu0 0.0
      %543 = vmatpush1.msra.mxu0 0.0
      %544 = vmatprep.subr.mxu0 0.0
      %545 = vmatpush1.msra.mxu0 0.0
      %546 = vmatprep.subr.mxu0 0.0
      %547 = vmatpush1.msra.mxu0 0.0
      %548 = vmatprep.subr.mxu0 0.0
      %549 = vmatpush1.msra.mxu0 0.0
      %550 = vmatprep.subr.mxu0 0.0
      %551 = vmatpush1.msra.mxu0 0.0
      %552 = vmatprep.subr.mxu0 0.0
      %553 = vmatpush1.msra.mxu0 0.0
      %554 = vmatprep.subr.mxu0 0.0
      %555 = vmatpush1.msra.mxu0 0.0
      %556 = vmatprep.subr.mxu0 0.0
      %557 = vmatpush1.msra.mxu0 0.0
      %558 = vmatprep.subr.mxu0 0.0
      %559 = vmatpush1.msra.mxu0 0.0
      %560 = vmatprep.subr.mxu0 0.0
      %561 = vmatpush1.msra.mxu0 0.0
      %562 = vmatprep.subr.mxu0 0.0
      %563 = vmatpush1.msra.mxu0 0.0
      %564 = vmatprep.subr.mxu0 0.0
      %565 = vmatpush1.msra.mxu0 0.0
      %566 = vmatprep.subr.mxu0 0.0
      %567 = vmatpush1.msra.mxu0 0.0
      %568 = vmatprep.subr.mxu0 0.0
      %569 = vmatpush1.msra.mxu0 0.0
      %570 = vmatprep.subr.mxu0 0.0
      %571 = vmatpush1.msra.mxu0 0.0
      %572 = vmatprep.mubr.f32.mxu0 0.0
      %573 = vmatmul.mubr.f32.gmra.mrb[0].mxu0 %v220
      %v574 = vpop.f32.mrb[0].mxu0
      %v575 = vadd.f32 0.0, %v574
      %v576 = vpop.f32.mrb[0].mxu0
      %577 = vmatprep.mubr.f32.mxu0 0.0
      %578 = vmatmul.mubr.f32.gmra.mrb[0].mxu0 %v222
      %v579 = vpop.f32.mrb[0].mxu0
      %v580 = vadd.f32 0.0, %v579
      %v581 = vpop.f32.mrb[0].mxu0
      %582 = vmatprep.mubr.f32.mxu0 0.0
      %583 = vmatmul.mubr.f32.gmra.mrb[0].mxu0 %v224
      %v584 = vpop.f32.mrb[0].mxu0
      %v585 = vadd.f32 0.0, %v584
      %v586 = vpop.f32.mrb[0].mxu0
      %587 = vmatprep.mubr.f32.mxu0 0.0
      %588 = vmatmul.mubr.f32.gmra.mrb[0].mxu0 %v506
      %v589 = vpop.f32.mrb[0].mxu0
      %v590 = vadd.f32 0.0, %v589
      %v591 = vpop.f32.mrb[0].mxu0
      %592 = vdwg.mxu0
      %v593 = vadd.f32 %v495, %v575
      %v594 = vadd.f32 %v496, %v580
      %v595 = vadd.f32 %v497, %v585
      %v596 = vadd.f32 %v498, %v590
      %vm597 = vcmask 64512
      %598 = vst.msk [vmem:[%s179] sm:$0xff] %vm597, %v593
      %599 = vst.msk [vmem:[%s179 + $0x8] sm:$0xff] %vm597, %v594
      %600 = vst.msk [vmem:[%s179 + $0x10] sm:$0xff] %vm597, %v595
      %601 = vst.msk [vmem:[%s179 + $0x18] sm:$0xff] %vm597, %v596
      %s602 = smul.u32 4, %s18
      %p603 = scmp.lt.s32.totalorder %s17, 1
      %s604 = scalar_select %p603, %s17, 1
      %p605 = scmp.lt.s32.totalorder %s602, 7
      %s606 = scalar_select %p605, %s602, 7
      %s607 = smul.addr %s604, 8
      %s608 = sadd.s32 %s606, %s607
      %s609 = smul.addr %s608, 8
      %s610 = scalar_lea.vmem %s2, %s609
      // Predicated region
      $region29: #{downsample.1} parent=27 // pred_check
        %p611 = pneg %p94
      $region30: #{downsample.1} parent=27 // pred_check_branch
        %613 = sbr.rel (%p611) target = $region32
      $region31: #{downsample.1} parent=27 // pred_region
        %s614 = smul.u32 4, %s18
      $region32: #{downsample.1} parent=27 // pred_fallthru
        _
    $region28: #{downsample.1} parent=5 // pred_fallthru
      _
    %p615 = scmp.le.s32.totalorder 2, %s8
    // Predicated region
    $region33: #{downsample.1} parent=5 // pred_check
      %p616 = pneg %p615
    $region34: #{downsample.1} parent=5 // pred_check_branch
      %618 = sbr.rel (%p616) target = $region36
    $region35: #{downsample.1} parent=5 // pred_region
      %s619 = ssub.s32 %s8, 2
      // Predicated region
      $region37: #{downsample.1} parent=35 // pred_check
        %p620 = pneg %p100
      $region38: #{downsample.1} parent=35 // pred_check_branch
        %622 = sbr.rel (%p620) target = $region40
      $region39: #{downsample.1} parent=35 // pred_region
        %s623 = smul.u32 4, %s20
        %p624 = scmp.lt.s32.totalorder %s19, 1
        %s625 = scalar_select %p624, %s19, 1
        %p626 = scmp.lt.s32.totalorder %s623, 7
        %s627 = scalar_select %p626, %s623, 7
        %s628 = smul.addr %s625, 8
        %s629 = sadd.s32 %s627, %s628
        %s630 = smul.addr %s629, 8
        %s631 = scalar_lea.vmem %s2, %s630
      $region40: #{downsample.1} parent=35 // pred_fallthru
        _
    $region36: #{downsample.1} parent=5 // pred_fallthru
      _
  $region6: #{downsample.1} parent=0 // loop_footer
    %s12 = sadd.s32 1, %s8
  $region7: #{downsample.1} parent=0 // loop_footer_branch
    %7 = sbr.rel target = $region3
  $region8: #{downsample.1} parent=0 // loop_exit
    _

</llo_original>
